<compile_context>
chip_gen: v5e
topology: v5e:2x2
jax: 0.10.0
libtpu: 0.0.40
codegen_flags: <defaults>
</compile_context>

<pallas_src>
import jax
import jax.numpy as jnp
from jax.experimental import pallas as pl
from jax.experimental.pallas import tpu as pltpu


def _round_up(x: int, m: int) -> int:
    return (x + m - 1) // m * m


def _regression_head_kernel(x_ref, w1_ref, b1_ref, w2_ref, b2_ref, o_ref):
    # Dense layer + tanh.  Dropout is identity in eval mode.
    # TODO(synk): training-mode dropout (stochastic masking) not implemented;
    # inference semantics (identity) are used.
    x = x_ref[...]
    h = jnp.tanh(
        jnp.dot(x, w1_ref[...], preferred_element_type=jnp.float32) + b1_ref[...]
    )
    # Output projection.  The original `k = 1/y; h = 6/k; out = -3 + h`
    # epilogue (== 6*y - 3) is folded into w2/b2 on the host, so this is
    # already the final result.  h is cast to the weight dtype so bf16 inputs
    # keep the MXU on its native bf16 path; accumulation stays f32.
    y = (
        jnp.dot(h.astype(w2_ref.dtype), w2_ref[...],
                preferred_element_type=jnp.float32)
        + b2_ref[...]
    )
    o_ref[...] = y.astype(o_ref.dtype)


def regression_head(features, w_dense, b_dense, w_out, b_out, *, block_m=32768):
    """features: (B, S, H); w_dense: (H, H); b_dense: (H,);
    w_out: (3, H); b_out: (3,).  Returns (B, S, 3) in features.dtype."""
    B, S, H = features.shape
    out_dim = w_out.shape[0]
    M = B * S

    x_dtype = features.dtype
    # bf16 activations stay bf16 (halves the dominant HBM read stream);
    # anything else computes against f32 weights.
    w_dtype = jnp.bfloat16 if x_dtype == jnp.bfloat16 else jnp.float32
    x_item = jnp.dtype(x_dtype).itemsize

    # Pack `pack` consecutive rows into one 128-lane vreg row (H=32 -> pack=4)
    # so loads / tanh (EUP) / MXU contraction depth are lane-dense.
    pack = 128 // H if (H < 128 and 128 % H == 0) else 1
    Hp = pack * H        # packed feature width (128 for H=32)
    Op = pack * out_dim  # packed output width (12 for out_dim=3)

    # Minimal padding: at most (pack-1) rows, skipped entirely in the common
    # case M % pack == 0 (no whole-input HBM copy before the kernel).
    M_pad = _round_up(M, pack)
    packed_rows = M_pad // pack

    x2d = features.reshape(M, H)
    if M_pad != M:
        x2d = jnp.pad(x2d, ((0, M_pad - M), (0, 0)))
    x_packed = x2d.reshape(packed_rows, Hp)  # pure reshape when no pad needed

    # ---- row-tile sizing (in packed rows) ----
    # Sublane alignment for the tile rule, dtype-aware (8 for f32, 16 for bf16).
    align = max(8, 32 // x_item)
    if packed_rows < align:
        # Tiny input: block equals the full array dims (allowed by the rule).
        tm = packed_rows
    else:
        tm = max(align, (min(block_m // pack, packed_rows) // align) * align)
        # v7x megacore: keep >= 2 grid steps so both TensorCores get work.
        if packed_rows >= 2 * align:
            half = _round_up(pl.cdiv(packed_rows, 2), align)
            tm = min(tm, half)
        # VMEM budget: double-buffered x tile + out tile kept under ~24 MiB so
        # the kernel fits v7x's 64 MiB VMEM / 32 MiB default scoped limit.
        bytes_per_packed_row = 2 * Hp * x_item + 2 * Op * x_item
        tm_cap = max(align, ((24 << 20) // bytes_per_packed_row) // align * align)
        tm = min(tm, tm_cap)
    grid_m = pl.cdiv(packed_rows, tm)  # partial last block handled by Pallas;
    # its OOB rows produce garbage that is discarded on write and sliced off.

    # ---- host-side weight prep (tiny, one-time) ----
    eye_p = jnp.eye(pack, dtype=jnp.float32)
    w1 = jnp.kron(eye_p, w_dense.T.astype(jnp.float32)).astype(w_dtype)      # (Hp, Hp)
    b1 = jnp.tile(b_dense.astype(jnp.float32), pack).reshape(1, Hp)
    # Fold the affine epilogue (6*y - 3) into the second layer.
    w2 = jnp.kron(eye_p, 6.0 * w_out.T.astype(jnp.float32)).astype(w_dtype)  # (Hp, Op)
    b2 = jnp.tile(6.0 * b_out.astype(jnp.float32) - 3.0, pack).reshape(1, Op)

    cost = pl.CostEstimate(
        flops=2 * packed_rows * Hp * (Hp + Op),
        transcendentals=packed_rows * Hp,
        bytes_accessed=packed_rows * (Hp + Op) * x_item
        + Hp * (Hp + Op) * jnp.dtype(w_dtype).itemsize
        + (Hp + Op) * 4,
    )

    out_packed = pl.pallas_call(
        _regression_head_kernel,
        out_shape=jax.ShapeDtypeStruct((packed_rows, Op), x_dtype),
        grid=(grid_m,),
        in_specs=[
            pl.BlockSpec((tm, Hp), lambda i: (i, 0)),   # x tile (pipelined)
            pl.BlockSpec((Hp, Hp), lambda i: (0, 0)),   # W1 (resident)
            pl.BlockSpec((1, Hp), lambda i: (0, 0)),    # b1 (resident)
            pl.BlockSpec((Hp, Op), lambda i: (0, 0)),   # W2' = 6*W_out^T
            pl.BlockSpec((1, Op), lambda i: (0, 0)),    # b2' = 6*b_out - 3
        ],
        out_specs=pl.BlockSpec((tm, Op), lambda i: (i, 0)),
        compiler_params=pltpu.CompilerParams(
            dimension_semantics=("parallel",),  # megacore sharding on v7x
        ),
        cost_estimate=cost,
    )(x_packed, w1, b1, w2, b2)

    out = out_packed.reshape(M_pad, out_dim)[:M]
    return out.reshape(B, S, out_dim)


def _reference(features, w_dense, b_dense, w_out, b_out):
    h = jnp.tanh(features @ w_dense.T + b_dense)
    y = h @ w_out.T + b_out
    return -3.0 + 6.0 * y


if __name__ == "__main__":
    # Module-consistent small shapes: batch=2, seq=8, hidden=32.
    B, S, H = 2, 8, 32
    key = jax.random.PRNGKey(0)
    k_x, k_w1, k_b1, k_w2, k_b2, k_x2, k_x3 = jax.random.split(key, 7)

    features = jax.random.normal(k_x, (B, S, H), dtype=jnp.float32)
    # Same shapes as nn.Linear(H, H) and nn.Linear(H, 3).
    w_dense = jax.random.normal(k_w1, (H, H), dtype=jnp.float32) * 0.05
    b_dense = jax.random.normal(k_b1, (H,), dtype=jnp.float32) * 0.05
    w_out = jax.random.normal(k_w2, (3, H), dtype=jnp.float32) * 0.05
    b_out = jax.random.normal(k_b2, (3,), dtype=jnp.float32) * 0.05

    # 1) Small shape, single full-dim block.
    out = jax.block_until_ready(
        regression_head(features, w_dense, b_dense, w_out, b_out))
    ref = _reference(features, w_dense, b_dense, w_out, b_out)
    assert out.shape == (B, S, 3)
    assert jnp.allclose(out, ref, atol=1e-4, rtol=1e-4)

    # 2) Ragged M with a multi-step grid and a partial last block (no pad-to-tile).
    B2, S2 = 2, 100  # M = 200, pack=4 -> 50 packed rows, tm=16 -> grid=4
    features2 = jax.random.normal(k_x2, (B2, S2, H), dtype=jnp.float32)
    out2 = jax.block_until_ready(
        regression_head(features2, w_dense, b_dense, w_out, b_out, block_m=64))
    ref2 = _reference(features2, w_dense, b_dense, w_out, b_out)
    assert out2.shape == (B2, S2, 3)
    assert jnp.allclose(out2, ref2, atol=1e-4, rtol=1e-4)

    # 3) M not divisible by the lane-pack factor (exercises the <=3-row pad path).
    B3, S3 = 1, 13
    features3 = jax.random.normal(k_x3, (B3, S3, H), dtype=jnp.float32)
    out3 = jax.block_until_ready(
        regression_head(features3, w_dense, b_dense, w_out, b_out))
    ref3 = _reference(features3, w_dense, b_dense, w_out, b_out)
    assert out3.shape == (B3, S3, 3)
    assert jnp.allclose(out3, ref3, atol=1e-4, rtol=1e-4)

    # 4) bf16 activations (dominant HBM stream halved, MXU-native path).
    B4, S4 = 2, 128
    features4 = jax.random.normal(k_x2, (B4, S4, H), dtype=jnp.float32).astype(
        jnp.bfloat16)
    out4 = jax.block_until_ready(
        regression_head(features4, w_dense, b_dense, w_out, b_out))
    ref4 = _reference(features4.astype(jnp.float32), w_dense, b_dense, w_out, b_out)
    assert out4.shape == (B4, S4, 3) and out4.dtype == jnp.bfloat16
    assert jnp.allclose(out4.astype(jnp.float32), ref4, atol=1e-1, rtol=5e-2)

    print("KERNEL_OK")
</pallas_src>

<mosaic_0001>
module attributes {stable_mosaic.version = 11 : i64} {
  func.func @_regression_head_kernel(%arg0: i32, %arg1: memref<4x128xf32, #tpu.memory_space<vmem>>, %arg2: memref<128x128xf32, #tpu.memory_space<vmem>>, %arg3: memref<1x128xf32, #tpu.memory_space<vmem>>, %arg4: memref<128x12xf32, #tpu.memory_space<vmem>>, %arg5: memref<1x12xf32, #tpu.memory_space<vmem>>, %arg6: memref<4x12xf32, #tpu.memory_space<vmem>>) attributes {dimension_semantics = [#tpu.dimension_semantics<parallel>], iteration_bounds = array<i64: 1>, scalar_prefetch = 0 : i64, scratch_operands = 0 : i64, tpu.core_type = #tpu.core_type<tc>, window_params = [{transform_indices = @transform_0, window_bounds = array<i64: 4, 128>}, {pipeline_mode = #tpu.pipeline_mode<synchronous>, transform_indices = @transform_1, window_bounds = array<i64: 128, 128>}, {pipeline_mode = #tpu.pipeline_mode<synchronous>, transform_indices = @transform_2, window_bounds = array<i64: 1, 128>}, {pipeline_mode = #tpu.pipeline_mode<synchronous>, transform_indices = @transform_3, window_bounds = array<i64: 128, 12>}, {pipeline_mode = #tpu.pipeline_mode<synchronous>, transform_indices = @transform_4, window_bounds = array<i64: 1, 12>}, {transform_indices = @transform_5, window_bounds = array<i64: 4, 12>}]} {
    %c0 = arith.constant 0 : index
    %c0_0 = arith.constant 0 : index
    %0 = vector.load %arg1[%c0, %c0_0] : memref<4x128xf32, #tpu.memory_space<vmem>>, vector<4x128xf32>
    %c0_1 = arith.constant 0 : index
    %c0_2 = arith.constant 0 : index
    %1 = vector.load %arg2[%c0_1, %c0_2] : memref<128x128xf32, #tpu.memory_space<vmem>>, vector<128x128xf32>
    %cst = arith.constant dense<0.000000e+00> : vector<4x128xf32>
    %2 = tpu.matmul %0, %1, %cst {dimension_numbers = #tpu.dot_dimension_numbers<[1], [0], [0], [1], [0, 0, 1, 1], [], []>} : vector<4x128xf32>, vector<128x128xf32>, vector<4x128xf32> -> vector<4x128xf32>
    %c0_3 = arith.constant 0 : index
    %c0_4 = arith.constant 0 : index
    %3 = vector.load %arg3[%c0_3, %c0_4] : memref<1x128xf32, #tpu.memory_space<vmem>>, vector<1x128xf32>
    %4 = vector.broadcast %3 : vector<1x128xf32> to vector<4x128xf32>
    %5 = arith.addf %2, %4 : vector<4x128xf32>
    %6 = math.tanh %5 : vector<4x128xf32>
    %c0_5 = arith.constant 0 : index
    %c0_6 = arith.constant 0 : index
    %7 = vector.load %arg4[%c0_5, %c0_6] : memref<128x12xf32, #tpu.memory_space<vmem>>, vector<128x12xf32>
    %cst_7 = arith.constant dense<0.000000e+00> : vector<4x12xf32>
    %8 = tpu.matmul %6, %7, %cst_7 {dimension_numbers = #tpu.dot_dimension_numbers<[1], [0], [0], [1], [0, 0, 1, 1], [], []>} : vector<4x128xf32>, vector<128x12xf32>, vector<4x12xf32> -> vector<4x12xf32>
    %c0_8 = arith.constant 0 : index
    %c0_9 = arith.constant 0 : index
    %9 = vector.load %arg5[%c0_8, %c0_9] : memref<1x12xf32, #tpu.memory_space<vmem>>, vector<1x12xf32>
    %10 = vector.broadcast %9 : vector<1x12xf32> to vector<4x12xf32>
    %11 = arith.addf %8, %10 : vector<4x12xf32>
    %c0_10 = arith.constant 0 : index
    %c0_11 = arith.constant 0 : index
    %12 = vector.load %arg6[%c0_10, %c0_11] : memref<4x12xf32, #tpu.memory_space<vmem>>, vector<4x12xf32>
    tpu.vector_store %arg6[%c0_10, %c0_11], %11 {strides = array<i32>} : memref<4x12xf32, #tpu.memory_space<vmem>>, vector<4x12xf32>,
    return
  }
  func.func @transform_0(%arg0: i32) -> (i32, i32) {
    %c0_i32 = arith.constant 0 : i32
    %c0_i32_0 = arith.constant 0 : i32
    return %arg0, %c0_i32 : i32, i32
  }
  func.func @transform_1(%arg0: i32) -> (i32, i32) {
    %c0_i32 = arith.constant 0 : i32
    %c0_i32_0 = arith.constant 0 : i32
    %c0_i32_1 = arith.constant 0 : i32
    return %c0_i32, %c0_i32_0 : i32, i32
  }
  func.func @transform_2(%arg0: i32) -> (i32, i32) {
    %c0_i32 = arith.constant 0 : i32
    %c0_i32_0 = arith.constant 0 : i32
    %c0_i32_1 = arith.constant 0 : i32
    return %c0_i32, %c0_i32_0 : i32, i32
  }
  func.func @transform_3(%arg0: i32) -> (i32, i32) {
    %c0_i32 = arith.constant 0 : i32
    %c0_i32_0 = arith.constant 0 : i32
    %c0_i32_1 = arith.constant 0 : i32
    return %c0_i32, %c0_i32_0 : i32, i32
  }
  func.func @transform_4(%arg0: i32) -> (i32, i32) {
    %c0_i32 = arith.constant 0 : i32
    %c0_i32_0 = arith.constant 0 : i32
    %c0_i32_1 = arith.constant 0 : i32
    return %c0_i32, %c0_i32_0 : i32, i32
  }
  func.func @transform_5(%arg0: i32) -> (i32, i32) {
    %c0_i32 = arith.constant 0 : i32
    %c0_i32_0 = arith.constant 0 : i32
    return %arg0, %c0_i32 : i32, i32
  }
}

</mosaic_0001>

<llo_original>
// kernel: tpu_custom_call.1
$region0: #{tpu_custom_call.1}
  #allocation0 [shape = 'u32[]', space=smem, size = 0x4, offset = 0x4, fixed_abs, tag = 'smem constant byte address 0x4 - core index']
  #allocation1 [shape = 'u32[72,128]{1,0:T(1,128)}', space=vmem, size = 0x9000, scoped, tag = 'internal scratch']
  %s0 = inlined_call_operand.vmem [shape: f32[4,128], index: 0, kind: input, shape index: {}]
  %s1 = inlined_call_operand.vmem [shape: f32[128,128], index: 1, kind: input, shape index: {}]
  %s2 = inlined_call_operand.vmem [shape: f32[1,128], index: 2, kind: input, shape index: {}]
  %s3 = inlined_call_operand.vmem [shape: f32[128,12], index: 3, kind: input, shape index: {}]
  %s4 = inlined_call_operand.vmem [shape: f32[1,12], index: 4, kind: input, shape index: {}]
  %s5 = inlined_call_operand.hbm [shape: f32[4,12], index: 5, kind: output, shape index: {}]
  %s6 = sld [smem:[#allocation0]]
  $region30: #{tpu_custom_call.1} parent=0
    _
  %s8 = ssub.s32 1, %s6
  %s9 = scalar_select 0, %s8, %s6
  $region1: #{tpu_custom_call.1} parent=0
    #allocation2 [shape = 'u8[2048]{0}', space=vmem, size = 0x800, scoped, tag = 'output window, operand 0, single buffered']
    #allocation3 [shape = 's32[1]{0}', space=sflag, size = 0x4, scoped, tag = 'scoped memory for tpu_custom_call.1']
    %10 = vsyncpa [#allocation3], 0
    // Predicated region
    $region2: #{tpu_custom_call.1} parent=1 // pred_check
      _
    $region3: #{tpu_custom_call.1} parent=1 // pred_check_branch
      %12 = sbr.rel (0) target = $region5
    $region4: #{tpu_custom_call.1} parent=1 // pred_region
      _
    $region5: #{tpu_custom_call.1} parent=1 // pred_fallthru
      _
    // Predicated region
    $region6: #{tpu_custom_call.1} parent=1 // pred_check
      _
    $region7: #{tpu_custom_call.1} parent=1 // pred_check_branch
      %14 = sbr.rel (0) target = $region9
    $region8: #{tpu_custom_call.1} parent=1 // pred_region
      _
    $region9: #{tpu_custom_call.1} parent=1 // pred_fallthru
      _
    // Predicated region
    $region10: #{tpu_custom_call.1} parent=1 // pred_check
      _
    $region11: #{tpu_custom_call.1} parent=1 // pred_check_branch
      %16 = sbr.rel (0) target = $region13
    $region12: #{tpu_custom_call.1} parent=1 // pred_region
      _
    $region13: #{tpu_custom_call.1} parent=1 // pred_fallthru
      _
    // Predicated region
    $region14: #{tpu_custom_call.1} parent=1 // pred_check
      _
    $region15: #{tpu_custom_call.1} parent=1 // pred_check_branch
      %18 = sbr.rel (0) target = $region17
    $region16: #{tpu_custom_call.1} parent=1 // pred_region
      _
    $region17: #{tpu_custom_call.1} parent=1 // pred_fallthru
      _
    // Predicated region
    $region18: #{tpu_custom_call.1} parent=1 // pred_check
      _
    $region19: #{tpu_custom_call.1} parent=1 // pred_check_branch
      %20 = sbr.rel (0) target = $region21
    $region20: #{tpu_custom_call.1} parent=1 // pred_region
      _
    $region21: #{tpu_custom_call.1} parent=1 // pred_fallthru
      _
    %v21 = vld [vmem:[%s0] sm:$0xf]
    %v22 = vld [vmem:[%s1] sm:$0xff]
    %v23 = vld [vmem:[%s1 + $0x8] sm:$0xff]
    %v24 = vld [vmem:[%s1 + $0x10] sm:$0xff]
    %v25 = vld [vmem:[%s1 + $0x18] sm:$0xff]
    %v26 = vld [vmem:[%s1 + $0x20] sm:$0xff]
    %v27 = vld [vmem:[%s1 + $0x28] sm:$0xff]
    %v28 = vld [vmem:[%s1 + $0x30] sm:$0xff]
    %v29 = vld [vmem:[%s1 + $0x38] sm:$0xff]
    %v30 = vld [vmem:[%s1 + $0x40] sm:$0xff]
    %v31 = vld [vmem:[%s1 + $0x48] sm:$0xff]
    %v32 = vld [vmem:[%s1 + $0x50] sm:$0xff]
    %v33 = vld [vmem:[%s1 + $0x58] sm:$0xff]
    %v34 = vld [vmem:[%s1 + $0x60] sm:$0xff]
    %v35 = vld [vmem:[%s1 + $0x68] sm:$0xff]
    %v36 = vld [vmem:[%s1 + $0x70] sm:$0xff]
    %v37 = vld [vmem:[%s1 + $0x78] sm:$0xff]
    %v38 = vld [vmem:[%s2] sm:$0x1]
    %v40 = vperm.slane %v38, 0
    %42 = vmatpush.msra.mxu0 %v37
    %43 = vmatpush.msra.mxu0 %v36
    %44 = vmatpush.msra.mxu0 %v35
    %45 = vmatpush.msra.mxu0 %v34
    %46 = vmatpush.msra.mxu0 %v33
    %47 = vmatpush.msra.mxu0 %v32
    %48 = vmatpush.msra.mxu0 %v31
    %49 = vmatpush.msra.mxu0 %v30
    %50 = vmatpush.msra.mxu0 %v29
    %51 = vmatpush.msra.mxu0 %v28
    %52 = vmatpush.msra.mxu0 %v27
    %53 = vmatpush.msra.mxu0 %v26
    %54 = vmatpush.msra.mxu0 %v25
    %55 = vmatpush.msra.mxu0 %v24
    %56 = vmatpush.msra.mxu0 %v23
    %57 = vmatpush.msra.mxu0 %v22
    %58 = vmatmul.f32.gmra.mxu0 %v21
    %v59 = vpop.f32.mrf.mxu0
    %v60 = vadd.f32 %v40, %v59
    %61 = vdwg.mxu0
    %v62 = vtanh.pop %v60
    %v63 = vld [vmem:[%s3] sm:$0xff]
    %v64 = vld [vmem:[%s3 + $0x8] sm:$0xff]
    %v65 = vld [vmem:[%s3 + $0x10] sm:$0xff]
    %v66 = vld [vmem:[%s3 + $0x18] sm:$0xff]
    %v67 = vld [vmem:[%s3 + $0x20] sm:$0xff]
    %v68 = vld [vmem:[%s3 + $0x28] sm:$0xff]
    %v69 = vld [vmem:[%s3 + $0x30] sm:$0xff]
    %v70 = vld [vmem:[%s3 + $0x38] sm:$0xff]
    %v71 = vld [vmem:[%s3 + $0x40] sm:$0xff]
    %v72 = vld [vmem:[%s3 + $0x48] sm:$0xff]
    %v73 = vld [vmem:[%s3 + $0x50] sm:$0xff]
    %v74 = vld [vmem:[%s3 + $0x58] sm:$0xff]
    %v75 = vld [vmem:[%s3 + $0x60] sm:$0xff]
    %v76 = vld [vmem:[%s3 + $0x68] sm:$0xff]
    %v77 = vld [vmem:[%s3 + $0x70] sm:$0xff]
    %v78 = vld [vmem:[%s3 + $0x78] sm:$0xff]
    %v79 = vld [vmem:[%s4] sm:$0x1]
    %v81 = vperm.slane %v79, 0
    %83 = vmatpush.msra.mxu0 %v78
    %84 = vmatpush.msra.mxu0 %v77
    %85 = vmatpush.msra.mxu0 %v76
    %86 = vmatpush.msra.mxu0 %v75
    %87 = vmatpush.msra.mxu0 %v74
    %88 = vmatpush.msra.mxu0 %v73
    %89 = vmatpush.msra.mxu0 %v72
    %90 = vmatpush.msra.mxu0 %v71
    %91 = vmatpush.msra.mxu0 %v70
    %92 = vmatpush.msra.mxu0 %v69
    %93 = vmatpush.msra.mxu0 %v68
    %94 = vmatpush.msra.mxu0 %v67
    %95 = vmatpush.msra.mxu0 %v66
    %96 = vmatpush.msra.mxu0 %v65
    %97 = vmatpush.msra.mxu0 %v64
    %98 = vmatpush.msra.mxu0 %v63
    %99 = vmatmul.f32.gmra.mxu0 %v62
    %v100 = vpop.f32.mrf.mxu0
    %v101 = vadd.f32 %v81, %v100
    %102 = vdwg.mxu0
    %vm103 = vcmask 93184
    %104 = vst.msk [vmem:[#allocation2] sm:$0xf] %vm103, %v101
    // Predicated region
    $region22: #{tpu_custom_call.1} parent=1 // pred_check
      _
    $region23: #{tpu_custom_call.1} parent=1 // pred_check_branch
      %106 = sbr.rel (0) target = $region25
    $region24: #{tpu_custom_call.1} parent=1 // pred_region
      %108 = vsyncadd [#allocation3], 0
      %s110 = sshll.u32 [#allocation2], 4
      %s111 = int_to_ptr.vmem [resolvable:$true] %s110
      %s112 = sshll.u32 %s5, 4
      %s113 = int_to_ptr.hbm [resolvable:$true] %s112
      %115 = dma.vmem_to_hbm [thread:$0]  %s111, 64, %s113, [#allocation3]
    $region25: #{tpu_custom_call.1} parent=1 // pred_fallthru
      _
    // Predicated region
    $region26: #{tpu_custom_call.1} parent=1 // pred_check
      _
    $region27: #{tpu_custom_call.1} parent=1 // pred_check_branch
      %117 = sbr.rel (0) target = $region29
    $region28: #{tpu_custom_call.1} parent=1 // pred_region
      %119 = dma.done [#allocation3], 64
    $region29: #{tpu_custom_call.1} parent=1 // pred_fallthru
      _
    %120 = vsyncpa [#allocation3], 1

</llo_original>
